<compile_context>
chip_gen: v7x
topology: tpu7x:2x2x1
jax: 0.10.0
libtpu: 0.0.40
codegen_flags: <defaults>
</compile_context>

<pallas_src>
import functools

import jax
import jax.numpy as jnp
from jax.experimental import pallas as pl
from jax.experimental.pallas import tpu as pltpu


# --------------------------------------------------------------------------
# Kernels
# --------------------------------------------------------------------------

def _se_fused_kernel(x_ref, w1t_ref, w2t_ref, o_ref):
    """Fused squeeze + excite + scale on one (Bt, C, HW) block.

    NCHW-native layout: C on sublanes, HW on lanes.
    """
    x = x_ref[...]                                                   # (Bt, C, HW)
    # Squeeze: mean over spatial (lanes); f32 accumulation fused into the
    # reduce — no materialized f32 copy of a bf16 block.
    y = jnp.mean(x, axis=2, dtype=jnp.float32)                       # (Bt, C)
    # Excite: fc1 -> ReLU -> fc2 -> sigmoid, batched over Bt.  MXU occupancy
    # is irrelevant here (DMA-bound); leave as plain dots.
    h = jnp.maximum(
        jnp.dot(y, w1t_ref[...], preferred_element_type=jnp.float32), 0.0)
    s = jax.nn.sigmoid(
        jnp.dot(h, w2t_ref[...], preferred_element_type=jnp.float32))  # (Bt, C)
    # Scale: per-(b, c) gate broadcast over spatial lanes, fused into the store.
    o_ref[...] = (x * s[:, :, None].astype(x.dtype)).astype(o_ref.dtype)


def _se_gate_kernel(x_ref, w1t_ref, w2t_ref, g_ref, acc_ref, *, hw_total):
    """Split path, pass 1: pooled sum accumulated over HW tiles; excitation
    MLP runs in the finalize of the last HW step.  Gate written as (Bt, C, 1)."""
    hw_step = pl.program_id(1)

    @pl.when(hw_step == 0)
    def _():
        acc_ref[...] = jnp.zeros_like(acc_ref)

    acc_ref[...] += jnp.sum(x_ref[...], axis=2, dtype=jnp.float32)   # (Bt, C)

    @pl.when(hw_step == pl.num_programs(1) - 1)
    def _():
        y = acc_ref[...] * (1.0 / hw_total)
        h = jnp.maximum(
            jnp.dot(y, w1t_ref[...], preferred_element_type=jnp.float32), 0.0)
        s = jax.nn.sigmoid(
            jnp.dot(h, w2t_ref[...], preferred_element_type=jnp.float32))
        g_ref[...] = s[:, :, None].astype(g_ref.dtype)               # (Bt, C, 1)


def _se_scale_kernel(x_ref, g_ref, o_ref):
    """Split path, pass 2: x * gate, tiled over (B, HW)."""
    x = x_ref[...]                                                   # (Bt, C, Ht)
    o_ref[...] = (x * g_ref[...].astype(x.dtype)).astype(o_ref.dtype)


# --------------------------------------------------------------------------
# Tiling / VMEM planning
# --------------------------------------------------------------------------

def _vmem_plan():
    """Per-generation VMEM plan: (per-block byte target, scoped VMEM limit)."""
    try:
        cap = int(pltpu.get_tpu_info().vmem_capacity_bytes)
    except Exception:  # pragma: no cover - conservative default if query fails
        cap = 64 << 20
    # Scoped limit: at most half of physical VMEM (64 MiB on v5e/v6e, 32 MiB
    # on v7x), leaving headroom for double buffering and temporaries.
    limit = min(cap // 2, 64 << 20)
    # Per-block budget: 2x(in) + 2x(out) double-buffered blocks + weights must
    # stay well under the limit.  ~8 MiB on v5e/v6e, ~4 MiB on v7x.
    target = min(12 << 20, max(1 << 20, limit // 8))
    return target, limit


def _divisors_desc(n):
    return sorted([d for d in range(1, n + 1) if n % d == 0], reverse=True)


def _pick_batch_tile(B, bytes_per_sample, target_bytes, min_steps=4):
    """Largest divisor Bt of B whose block fits the budget, then shrunk until
    the grid has >= min_steps steps (2 per TensorCore on v7x) when B allows."""
    divs = _divisors_desc(B)
    fit = next((d for d in divs if d * bytes_per_sample <= target_bytes), 1)
    for d in divs:
        if d <= fit and B // d >= min_steps:
            return d
    # min_steps unreachable: still expose at least 2 steps when B > 1.
    if fit == B and B > 1:
        fit = next(d for d in divs if d < B)
    return fit


# --------------------------------------------------------------------------
# Wrapper
# --------------------------------------------------------------------------

def se_layer(x_nchw, w1, w2, *, force_split=False, block_bytes=None):
    """SELayer forward, NCHW-native (no wrapper transposes).

    x_nchw: (B, C, H, W)   (PyTorch NCHW convention)
    w1    : (C // r, C)    fc1 weight (torch Linear (out, in) layout, no bias)
    w2    : (C, C // r)    fc2 weight
    returns (B, C, H, W)
    """
    B, C, H, W = x_nchw.shape
    HW = H * W
    c_red = w1.shape[0]
    itemsize = x_nchw.dtype.itemsize

    # (B, C, H, W) -> (B, C, HW) is a free, contiguous view: no transpose,
    # no extra HBM traffic.
    x = x_nchw.reshape(B, C, HW)
    w1t = w1.T   # (C, C_red)
    w2t = w2.T   # (C_red, C)

    target_bytes, vmem_limit = _vmem_plan()
    if block_bytes is not None:
        target_bytes = block_bytes
    bytes_per_sample = C * HW * itemsize

    cost = pl.CostEstimate(
        flops=2 * 2 * B * C * c_red,                # fc1 + fc2
        transcendentals=B * C,                      # sigmoid
        bytes_accessed=2 * B * C * HW * itemsize)   # read x + write out

    if not force_split and bytes_per_sample <= target_bytes:
        # -------- Fused single-pass path: grid over batch only ------------
        bt = _pick_batch_tile(B, bytes_per_sample, target_bytes)
        out = pl.pallas_call(
            _se_fused_kernel,
            out_shape=jax.ShapeDtypeStruct((B, C, HW), x.dtype),
            grid_spec=pltpu.PrefetchScalarGridSpec(
                num_scalar_prefetch=0,
                grid=(B // bt,),
                in_specs=[
                    pl.BlockSpec((bt, C, HW), lambda b: (b, 0, 0)),   # x block
                    pl.BlockSpec((C, c_red), lambda b: (0, 0)),       # w1^T resident
                    pl.BlockSpec((c_red, C), lambda b: (0, 0)),       # w2^T resident
                ],
                out_specs=pl.BlockSpec((bt, C, HW), lambda b: (b, 0, 0)),
            ),
            compiler_params=pltpu.CompilerParams(
                dimension_semantics=("parallel",),
                vmem_limit_bytes=vmem_limit),
            cost_estimate=cost,
        )(x, w1t, w2t)
        return out.reshape(B, C, H, W)

    # -------- Split two-pass path: B=1 / very large feature maps ----------
    # Spatial tile: largest lane-aligned (multiple of 128) divisor of HW that
    # fits the budget; otherwise fall back to the full HW extent.
    ht = HW
    for d in _divisors_desc(HW):
        if d % 128 == 0 and C * d * itemsize <= target_bytes:
            ht = d
            break
    bt = _pick_batch_tile(B, C * ht * itemsize, target_bytes, min_steps=2)
    n_hw = HW // ht

    gate = pl.pallas_call(
        functools.partial(_se_gate_kernel, hw_total=float(HW)),
        out_shape=jax.ShapeDtypeStruct((B, C, 1), jnp.float32),
        grid_spec=pltpu.PrefetchScalarGridSpec(
            num_scalar_prefetch=0,
            grid=(B // bt, n_hw),
            in_specs=[
                pl.BlockSpec((bt, C, ht), lambda b, h: (b, 0, h)),
                pl.BlockSpec((C, c_red), lambda b, h: (0, 0)),
                pl.BlockSpec((c_red, C), lambda b, h: (0, 0)),
            ],
            out_specs=pl.BlockSpec((bt, C, 1), lambda b, h: (b, 0, 0)),
            scratch_shapes=[pltpu.VMEM((bt, C), jnp.float32)],
        ),
        compiler_params=pltpu.CompilerParams(
            dimension_semantics=("parallel", "arbitrary"),
            vmem_limit_bytes=vmem_limit),
    )(x, w1t, w2t)

    out = pl.pallas_call(
        _se_scale_kernel,
        out_shape=jax.ShapeDtypeStruct((B, C, HW), x.dtype),
        grid_spec=pltpu.PrefetchScalarGridSpec(
            num_scalar_prefetch=0,
            grid=(B // bt, n_hw),
            in_specs=[
                pl.BlockSpec((bt, C, ht), lambda b, h: (b, 0, h)),
                pl.BlockSpec((bt, C, 1), lambda b, h: (b, 0, 0)),
            ],
            out_specs=pl.BlockSpec((bt, C, ht), lambda b, h: (b, 0, h)),
        ),
        compiler_params=pltpu.CompilerParams(
            dimension_semantics=("parallel", "parallel"),
            vmem_limit_bytes=vmem_limit),
        cost_estimate=cost,
    )(x, gate)
    return out.reshape(B, C, H, W)


# --------------------------------------------------------------------------
# Reference + self-test
# --------------------------------------------------------------------------

def se_layer_ref(x_nchw, w1, w2):
    """Pure-JAX reference matching the PyTorch forward."""
    y = jnp.mean(x_nchw.astype(jnp.float32), axis=(2, 3))   # (B, C)
    y = jnp.maximum(y @ w1.T, 0.0)                           # (B, C//r)
    y = jax.nn.sigmoid(y @ w2.T)                             # (B, C)
    return x_nchw.astype(jnp.float32) * y[:, :, None, None]


if __name__ == "__main__":
    reduction = 16
    key = jax.random.PRNGKey(0)
    kx, k1, k2, kx2 = jax.random.split(key, 4)

    # ---- main fused path: small but representative SE-block shapes -------
    B, C, H, W = 2, 128, 8, 8
    c_red = C // reduction
    x = jax.random.normal(kx, (B, C, H, W), dtype=jnp.float32)

    # torch.nn.Linear default init (uniform +/- 1/sqrt(fan_in)), bias=False.
    bound1 = 1.0 / jnp.sqrt(jnp.float32(C))
    bound2 = 1.0 / jnp.sqrt(jnp.float32(c_red))
    w1 = jax.random.uniform(k1, (c_red, C), jnp.float32, -bound1, bound1)
    w2 = jax.random.uniform(k2, (C, c_red), jnp.float32, -bound2, bound2)

    out = jax.block_until_ready(se_layer(x, w1, w2))
    ref = se_layer_ref(x, w1, w2)
    assert out.shape == (B, C, H, W)
    assert jnp.allclose(out, ref, atol=1e-5, rtol=1e-5), "fused path mismatch"

    # ---- bf16 smoke test on the fused path (loose tolerance) -------------
    x_bf16 = x.astype(jnp.bfloat16)
    out_bf16 = jax.block_until_ready(se_layer(x_bf16, w1, w2))
    assert out_bf16.dtype == jnp.bfloat16
    assert jnp.allclose(out_bf16.astype(jnp.float32), ref, atol=5e-2, rtol=5e-2), \
        "bf16 fused path mismatch"

    # ---- split (large-HW) path, forced with a small block budget ---------
    B2, H2, W2 = 2, 16, 16
    x2 = jax.random.normal(kx2, (B2, C, H2, W2), dtype=jnp.float32)
    out2 = jax.block_until_ready(
        se_layer(x2, w1, w2, force_split=True, block_bytes=C * 128 * 4))
    ref2 = se_layer_ref(x2, w1, w2)
    assert out2.shape == (B2, C, H2, W2)
    assert jnp.allclose(out2, ref2, atol=1e-5, rtol=1e-5), "split path mismatch"

    print("KERNEL_OK")
</pallas_src>

<mosaic_0001>
module attributes {stable_mosaic.version = 11 : i64} {
  func.func @_se_fused_kernel(%arg0: i32, %arg1: memref<1x128x64xf32, #tpu.memory_space<vmem>>, %arg2: memref<128x8xf32, #tpu.memory_space<vmem>>, %arg3: memref<8x128xf32, #tpu.memory_space<vmem>>, %arg4: memref<1x128x64xf32, #tpu.memory_space<vmem>>) attributes {dimension_semantics = [#tpu.dimension_semantics<parallel>], iteration_bounds = array<i64: 2>, scalar_prefetch = 0 : i64, scratch_operands = 0 : i64, tpu.core_type = #tpu.core_type<tc>, window_params = [{transform_indices = @transform_0, window_bounds = array<i64: 1, 128, 64>}, {pipeline_mode = #tpu.pipeline_mode<synchronous>, transform_indices = @transform_1, window_bounds = array<i64: 128, 8>}, {pipeline_mode = #tpu.pipeline_mode<synchronous>, transform_indices = @transform_2, window_bounds = array<i64: 8, 128>}, {transform_indices = @transform_3, window_bounds = array<i64: 1, 128, 64>}]} {
    %c0 = arith.constant 0 : index
    %c0_0 = arith.constant 0 : index
    %c0_1 = arith.constant 0 : index
    %0 = vector.load %arg1[%c0, %c0_0, %c0_1] : memref<1x128x64xf32, #tpu.memory_space<vmem>>, vector<1x128x64xf32>
    %cst = arith.constant dense<0.000000e+00> : vector<1x128xf32>
    %1 = vector.multi_reduction <add>, %0, %cst [2] : vector<1x128x64xf32> to vector<1x128xf32>
    %cst_2 = arith.constant 6.400000e+01 : f32
    %2 = vector.broadcast %cst_2 : f32 to vector<1x128xf32>
    %3 = arith.divf %1, %2 : vector<1x128xf32>
    %c0_3 = arith.constant 0 : index
    %c0_4 = arith.constant 0 : index
    %4 = vector.load %arg2[%c0_3, %c0_4] : memref<128x8xf32, #tpu.memory_space<vmem>>, vector<128x8xf32>
    %cst_5 = arith.constant dense<0.000000e+00> : vector<1x8xf32>
    %5 = tpu.matmul %3, %4, %cst_5 {dimension_numbers = #tpu.dot_dimension_numbers<[1], [0], [0], [1], [0, 0, 1, 1], [], []>} : vector<1x128xf32>, vector<128x8xf32>, vector<1x8xf32> -> vector<1x8xf32>
    %cst_6 = arith.constant 0.000000e+00 : f32
    %6 = vector.broadcast %cst_6 : f32 to vector<1x8xf32>
    %7 = arith.maximumf %5, %6 : vector<1x8xf32>
    %c0_7 = arith.constant 0 : index
    %c0_8 = arith.constant 0 : index
    %8 = vector.load %arg3[%c0_7, %c0_8] : memref<8x128xf32, #tpu.memory_space<vmem>>, vector<8x128xf32>
    %cst_9 = arith.constant dense<0.000000e+00> : vector<1x128xf32>
    %9 = tpu.matmul %7, %8, %cst_9 {dimension_numbers = #tpu.dot_dimension_numbers<[1], [0], [0], [1], [0, 0, 1, 1], [], []>} : vector<1x8xf32>, vector<8x128xf32>, vector<1x128xf32> -> vector<1x128xf32>
    %10 = arith.negf %9 : vector<1x128xf32>
    %11 = math.exp %10 : vector<1x128xf32>
    %cst_10 = arith.constant 1.000000e+00 : f32
    %12 = vector.broadcast %cst_10 : f32 to vector<1x128xf32>
    %13 = arith.addf %12, %11 : vector<1x128xf32>
    %14 = arith.divf %12, %13 : vector<1x128xf32>
    %15 = vector.shape_cast %14 : vector<1x128xf32> to vector<1x128x1xf32>
    %16 = vector.broadcast %15 : vector<1x128x1xf32> to vector<1x128x64xf32>
    %17 = arith.mulf %0, %16 : vector<1x128x64xf32>
    %c0_11 = arith.constant 0 : index
    %c0_12 = arith.constant 0 : index
    %c0_13 = arith.constant 0 : index
    %18 = vector.load %arg4[%c0_11, %c0_12, %c0_13] : memref<1x128x64xf32, #tpu.memory_space<vmem>>, vector<1x128x64xf32>
    tpu.vector_store %arg4[%c0_11, %c0_12, %c0_13], %17 {strides = array<i32>} : memref<1x128x64xf32, #tpu.memory_space<vmem>>, vector<1x128x64xf32>,
    return
  }
  func.func @transform_0(%arg0: i32) -> (i32, i32, i32) {
    %c0_i32 = arith.constant 0 : i32
    %c0_i32_0 = arith.constant 0 : i32
    %c0_i32_1 = arith.constant 0 : i32
    return %arg0, %c0_i32, %c0_i32_0 : i32, i32, i32
  }
  func.func @transform_1(%arg0: i32) -> (i32, i32) {
    %c0_i32 = arith.constant 0 : i32
    %c0_i32_0 = arith.constant 0 : i32
    %c0_i32_1 = arith.constant 0 : i32
    return %c0_i32, %c0_i32_0 : i32, i32
  }
  func.func @transform_2(%arg0: i32) -> (i32, i32) {
    %c0_i32 = arith.constant 0 : i32
    %c0_i32_0 = arith.constant 0 : i32
    %c0_i32_1 = arith.constant 0 : i32
    return %c0_i32, %c0_i32_0 : i32, i32
  }
  func.func @transform_3(%arg0: i32) -> (i32, i32, i32) {
    %c0_i32 = arith.constant 0 : i32
    %c0_i32_0 = arith.constant 0 : i32
    %c0_i32_1 = arith.constant 0 : i32
    return %arg0, %c0_i32, %c0_i32_0 : i32, i32, i32
  }
}

</mosaic_0001>

<llo_original>
// kernel: tpu_custom_call.1
$region0: #{tpu_custom_call.1}
  #allocation0 [shape = 'u32[]', space=smem, size = 0x4, offset = 0x4, fixed_abs, tag = 'smem constant byte address 0x4 - core index']
  #allocation1 [shape = 'u32[144,128]{1,0:T(1,128)}', space=vmem, size = 0x12000, scoped, tag = 'internal scratch']
  %s0 = inlined_call_operand.vmem [shape: f32[2,128,64], index: 0, kind: input, shape index: {}]
  %s1 = inlined_call_operand.vmem [shape: f32[128,8], index: 1, kind: input, shape index: {}]
  %s2 = inlined_call_operand.vmem [shape: f32[8,128], index: 2, kind: input, shape index: {}]
  %s3 = inlined_call_operand.vmem [shape: f32[2,128,64], index: 3, kind: output, shape index: {}]
  %s4 = sld [smem:[#allocation0]]
  $region45: #{tpu_custom_call.1} parent=0
    _
  %s6 = ssub.s32 1, %s4
  %s7 = scalar_select 0, %s6, %s4
  loop: start=0, step=1, limit=4
  $region2: #{tpu_custom_call.1} parent=0 // loop_pre_header
    _
  $region3: #{tpu_custom_call.1} parent=0 // loop_header
    %s9 = sphi 0, %s13
    %p10 = scmp.ge.s32.totalorder %s9, 4
    %s19 = sphi 0, %s21
    %s22 = sphi 0, %s19
    %s23 = sphi 0, %s22
    %s39 = sphi 0, %s23
    %s43 = sphi 0, %s43
    %s45 = sphi 0, %s43
    %s46 = sphi 0, %s45
    %s60 = sphi 0, %s46
    %s64 = sphi 0, %s64
    %s66 = sphi 0, %s64
    %s67 = sphi 0, %s66
    %s81 = sphi 0, %s67
    %s87 = sphi 0, %s89
    %s90 = sphi 0, %s87
    %s91 = sphi 0, %s90
    %s107 = sphi 0, %s91
  $region4: #{tpu_custom_call.1} parent=0 // loop_header_branch
    %12 = sbr.rel (%p10) target = $region8
  $region5: #{tpu_custom_call.1} parent=0 // loop_body
    %s14 = ssub.s32 %s9, 1
    %s15 = ssub.s32 %s9, 2
    %s16 = sadd.s32 %s9, 1
    %s17 = ssub.s32 %s9, %s16
    %p18 = scmp.eq.s32.totalorder %s17, 0
    %s20 = sadd.s32 %s19, 1
    %s21 = scalar_select %p18, %s19, %s20
    %p24 = pneg %p18
    %p25 = scmp.eq.s32.totalorder %s9, 1
    %p26 = por %p24, %p25
    %p27 = scmp.ne.s32.totalorder %s19, %s22
    %p28 = scmp.eq.s32.totalorder %s9, 0
    %p29 = por %p27, %p28
    %p30 = scmp.ne.s32.totalorder %s19, %s22
    %p31 = scmp.eq.s32.totalorder %s14, 1
    %p32 = por %p30, %p31
    %p33 = scmp.ne.s32.totalorder %s22, %s23
    %p34 = scmp.eq.s32.totalorder %s14, 0
    %p35 = por %p33, %p34
    %p36 = scmp.ne.s32.totalorder %s22, %s23
    %p37 = scmp.eq.s32.totalorder %s15, 1
    %p38 = por %p36, %p37
    %p40 = scmp.ne.s32.totalorder %s23, %s39
    %p41 = scmp.eq.s32.totalorder %s15, 0
    %p42 = por %p40, %p41
    %s44 = sadd.s32 %s43, 1
    %p47 = scmp.eq.s32.totalorder %s9, 1
    %p48 = scmp.ne.s32.totalorder %s43, %s45
    %p49 = scmp.eq.s32.totalorder %s9, 0
    %p50 = por %p48, %p49
    %p51 = scmp.ne.s32.totalorder %s43, %s45
    %p52 = scmp.eq.s32.totalorder %s14, 1
    %p53 = por %p51, %p52
    %p54 = scmp.ne.s32.totalorder %s45, %s46
    %p55 = scmp.eq.s32.totalorder %s14, 0
    %p56 = por %p54, %p55
    %p57 = scmp.ne.s32.totalorder %s45, %s46
    %p58 = scmp.eq.s32.totalorder %s15, 1
    %p59 = por %p57, %p58
    %p61 = scmp.ne.s32.totalorder %s46, %s60
    %p62 = scmp.eq.s32.totalorder %s15, 0
    %p63 = por %p61, %p62
    %s65 = sadd.s32 %s64, 1
    %p68 = scmp.eq.s32.totalorder %s9, 1
    %p69 = scmp.ne.s32.totalorder %s64, %s66
    %p70 = scmp.eq.s32.totalorder %s9, 0
    %p71 = por %p69, %p70
    %p72 = scmp.ne.s32.totalorder %s64, %s66
    %p73 = scmp.eq.s32.totalorder %s14, 1
    %p74 = por %p72, %p73
    %p75 = scmp.ne.s32.totalorder %s66, %s67
    %p76 = scmp.eq.s32.totalorder %s14, 0
    %p77 = por %p75, %p76
    %p78 = scmp.ne.s32.totalorder %s66, %s67
    %p79 = scmp.eq.s32.totalorder %s15, 1
    %p80 = por %p78, %p79
    %p82 = scmp.ne.s32.totalorder %s67, %s81
    %p83 = scmp.eq.s32.totalorder %s15, 0
    %p84 = por %p82, %p83
    %s85 = ssub.s32 %s9, %s16
    %p86 = scmp.eq.s32.totalorder %s85, 0
    %s88 = sadd.s32 %s87, 1
    %s89 = scalar_select %p86, %s87, %s88
    %p92 = pneg %p86
    %p93 = scmp.eq.s32.totalorder %s9, 1
    %p94 = por %p92, %p93
    %p95 = scmp.ne.s32.totalorder %s87, %s90
    %p96 = scmp.eq.s32.totalorder %s9, 0
    %p97 = por %p95, %p96
    %p98 = scmp.ne.s32.totalorder %s87, %s90
    %p99 = scmp.eq.s32.totalorder %s14, 1
    %p100 = por %p98, %p99
    %p101 = scmp.ne.s32.totalorder %s90, %s91
    %p102 = scmp.eq.s32.totalorder %s14, 0
    %p103 = por %p101, %p102
    %p104 = scmp.ne.s32.totalorder %s90, %s91
    %p105 = scmp.eq.s32.totalorder %s15, 1
    %p106 = por %p104, %p105
    %p108 = scmp.ne.s32.totalorder %s91, %s107
    %p109 = scmp.eq.s32.totalorder %s15, 0
    %p110 = por %p108, %p109
    %p111 = scmp.le.s32.totalorder 1, %s9
    %p112 = scmp.lt.s32.totalorder %s9, 3
    %p113 = pnand %p111, %p112
    %p114 = pneg %p113
    // Predicated region
    $region9: #{tpu_custom_call.1} parent=5 // pred_check
      _
    $region10: #{tpu_custom_call.1} parent=5 // pred_check_branch
      %116 = sbr.rel (%p113) target = $region12
    $region11: #{tpu_custom_call.1} parent=5 // pred_region
      %s117 = ssub.s32 %s9, 1
      // Predicated region
      $region13: #{tpu_custom_call.1} parent=11 // pred_check
        %p118 = pneg %p56
      $region14: #{tpu_custom_call.1} parent=11 // pred_check_branch
        %120 = sbr.rel (%p118) target = $region16
      $region15: #{tpu_custom_call.1} parent=11 // pred_region
        _
      $region16: #{tpu_custom_call.1} parent=11 // pred_fallthru
        _
      // Predicated region
      $region17: #{tpu_custom_call.1} parent=11 // pred_check
        %p121 = pneg %p77
      $region18: #{tpu_custom_call.1} parent=11 // pred_check_branch
        %123 = sbr.rel (%p121) target = $region20
      $region19: #{tpu_custom_call.1} parent=11 // pred_region
        _
      $region20: #{tpu_custom_call.1} parent=11 // pred_fallthru
        _
    $region12: #{tpu_custom_call.1} parent=5 // pred_fallthru
      _
    %p124 = scmp.lt.s32.totalorder %s9, 2
    // Predicated region
    $region21: #{tpu_custom_call.1} parent=5 // pred_check
      %p125 = pneg %p124
    $region22: #{tpu_custom_call.1} parent=5 // pred_check_branch
      %127 = sbr.rel (%p125) target = $region24
    $region23: #{tpu_custom_call.1} parent=5 // pred_region
      // Predicated region
      $region25: #{tpu_custom_call.1} parent=23 // pred_check
        %p128 = pneg %p29
      $region26: #{tpu_custom_call.1} parent=23 // pred_check_branch
        %130 = sbr.rel (%p128) target = $region28
      $region27: #{tpu_custom_call.1} parent=23 // pred_region
        %p131 = scmp.lt.s32.totalorder %s9, 1
        %s132 = scalar_select %p131, %s9, 1
        %s133 = smul.addr %s132, 16
        %s134 = smul.addr %s133, 8
        %s135 = scalar_lea.vmem %s0, %s134
      $region28: #{tpu_custom_call.1} parent=23 // pred_fallthru
        _
    $region24: #{tpu_custom_call.1} parent=5 // pred_fallthru
      _
    %p136 = scmp.le.s32.totalorder 1, %s9
    %p137 = scmp.lt.s32.totalorder %s9, 3
    %p138 = pnand %p136, %p137
    %p139 = pneg %p138
    // Predicated region
    $region29: #{tpu_custom_call.1} parent=5 // pred_check
      _
    $region30: #{tpu_custom_call.1} parent=5 // pred_check_branch
      %141 = sbr.rel (%p138) target = $region32
    $region31: #{tpu_custom_call.1} parent=5 // pred_region
      %s142 = ssub.s32 %s9, 1
      %p143 = scmp.lt.s32.totalorder %s14, 1
      %s144 = scalar_select %p143, %s14, 1
      %s145 = smul.addr %s144, 16
      %s146 = smul.addr %s145, 8
      %s147 = scalar_lea.vmem %s0, %s146
      %p148 = pneg %p35
      %p149 = pneg %p32
      %p150 = pneg %p56
      %p151 = pneg %p53
      %p152 = pneg %p77
      %p153 = pneg %p74
      %p154 = pneg %p103
      %p155 = pneg %p100
      %p156 = scmp.lt.s32.totalorder %s14, 1
      %s157 = scalar_select %p156, %s14, 1
      %s158 = smul.addr %s157, 16
      %s159 = smul.addr %s158, 8
      %s160 = scalar_lea.vmem %s3, %s159
      %p161 = scmp.lt.s32.totalorder %s14, 1
      %s162 = scalar_select %p161, %s14, 1
      %s163 = smul.addr %s162, 16
      %s164 = smul.addr %s163, 8
      %s165 = scalar_lea.vmem %s0, %s164
      %p166 = scmp.lt.s32.totalorder %s14, 1
      %s167 = scalar_select %p166, %s14, 1
      %s168 = smul.addr %s167, 16
      %s169 = smul.addr %s168, 8
      %s170 = scalar_lea.vmem %s3, %s169
      %v171 = vld [vmem:[%s165] sm:$0xff]
      %v172 = vld [vmem:[%s165 + $0x8] sm:$0xff]
      %v173 = vld [vmem:[%s165 + $0x10] sm:$0xff]
      %v174 = vld [vmem:[%s165 + $0x18] sm:$0xff]
      %v175 = vld [vmem:[%s165 + $0x20] sm:$0xff]
      %v176 = vld [vmem:[%s165 + $0x28] sm:$0xff]
      %v177 = vld [vmem:[%s165 + $0x30] sm:$0xff]
      %v178 = vld [vmem:[%s165 + $0x38] sm:$0xff]
      %v179 = vld [vmem:[%s165 + $0x40] sm:$0xff]
      %v180 = vld [vmem:[%s165 + $0x48] sm:$0xff]
      %v181 = vld [vmem:[%s165 + $0x50] sm:$0xff]
      %v182 = vld [vmem:[%s165 + $0x58] sm:$0xff]
      %v183 = vld [vmem:[%s165 + $0x60] sm:$0xff]
      %v184 = vld [vmem:[%s165 + $0x68] sm:$0xff]
      %v185 = vld [vmem:[%s165 + $0x70] sm:$0xff]
      %v186 = vld [vmem:[%s165 + $0x78] sm:$0xff]
      %vm187 = vcmask 523264
      %v188 = vsel %vm187, %v171, 0.0
      %189 = vadd.xlane.f32.xlu0 %v188
      %v190 = vpop.xlane.xlu0 %189
      %v191 = vsel %vm187, %v172, 0.0
      %192 = vadd.xlane.f32.xlu0 %v191
      %v193 = vpop.xlane.xlu0 %192
      %v194 = vsel %vm187, %v173, 0.0
      %195 = vadd.xlane.f32.xlu0 %v194
      %v196 = vpop.xlane.xlu0 %195
      %v197 = vsel %vm187, %v174, 0.0
      %198 = vadd.xlane.f32.xlu0 %v197
      %v199 = vpop.xlane.xlu0 %198
      %v200 = vsel %vm187, %v175, 0.0
      %201 = vadd.xlane.f32.xlu0 %v200
      %v202 = vpop.xlane.xlu0 %201
      %v203 = vsel %vm187, %v176, 0.0
      %204 = vadd.xlane.f32.xlu0 %v203
      %v205 = vpop.xlane.xlu0 %204
      %v206 = vsel %vm187, %v177, 0.0
      %207 = vadd.xlane.f32.xlu0 %v206
      %v208 = vpop.xlane.xlu0 %207
      %v209 = vsel %vm187, %v178, 0.0
      %210 = vadd.xlane.f32.xlu0 %v209
      %v211 = vpop.xlane.xlu0 %210
      %v212 = vsel %vm187, %v179, 0.0
      %213 = vadd.xlane.f32.xlu0 %v212
      %v214 = vpop.xlane.xlu0 %213
      %v215 = vsel %vm187, %v180, 0.0
      %216 = vadd.xlane.f32.xlu0 %v215
      %v217 = vpop.xlane.xlu0 %216
      %v218 = vsel %vm187, %v181, 0.0
      %219 = vadd.xlane.f32.xlu0 %v218
      %v220 = vpop.xlane.xlu0 %219
      %v221 = vsel %vm187, %v182, 0.0
      %222 = vadd.xlane.f32.xlu0 %v221
      %v223 = vpop.xlane.xlu0 %222
      %v224 = vsel %vm187, %v183, 0.0
      %225 = vadd.xlane.f32.xlu0 %v224
      %v226 = vpop.xlane.xlu0 %225
      %v227 = vsel %vm187, %v184, 0.0
      %228 = vadd.xlane.f32.xlu0 %v227
      %v229 = vpop.xlane.xlu0 %228
      %v230 = vsel %vm187, %v185, 0.0
      %231 = vadd.xlane.f32.xlu0 %v230
      %v232 = vpop.xlane.xlu0 %231
      %v233 = vsel %vm187, %v186, 0.0
      %234 = vadd.xlane.f32.xlu0 %v233
      %v235 = vpop.xlane.xlu0 %234
      %v236 = vrcp.pop 64.0
      %v237 = vmul.f32 %v190, %v236
      %v238 = vmul.f32 %v193, %v236
      %v239 = vmul.f32 %v196, %v236
      %v240 = vmul.f32 %v199, %v236
      %v241 = vmul.f32 %v202, %v236
      %v242 = vmul.f32 %v205, %v236
      %v243 = vmul.f32 %v208, %v236
      %v244 = vmul.f32 %v211, %v236
      %v245 = vmul.f32 %v214, %v236
      %v246 = vmul.f32 %v217, %v236
      %v247 = vmul.f32 %v220, %v236
      %v248 = vmul.f32 %v223, %v236
      %v249 = vmul.f32 %v226, %v236
      %v250 = vmul.f32 %v229, %v236
      %v251 = vmul.f32 %v232, %v236
      %v252 = vmul.f32 %v235, %v236
      %v253 = vld [vmem:[%s1] sm:$0xff]
      %v254 = vld [vmem:[%s1 + $0x8] sm:$0xff]
      %v255 = vld [vmem:[%s1 + $0x10] sm:$0xff]
      %v256 = vld [vmem:[%s1 + $0x18] sm:$0xff]
      %v257 = vld [vmem:[%s1 + $0x20] sm:$0xff]
      %v258 = vld [vmem:[%s1 + $0x28] sm:$0xff]
      %v259 = vld [vmem:[%s1 + $0x30] sm:$0xff]
      %v260 = vld [vmem:[%s1 + $0x38] sm:$0xff]
      %v261 = vld [vmem:[%s1 + $0x40] sm:$0xff]
      %v262 = vld [vmem:[%s1 + $0x48] sm:$0xff]
      %v263 = vld [vmem:[%s1 + $0x50] sm:$0xff]
      %v264 = vld [vmem:[%s1 + $0x58] sm:$0xff]
      %v265 = vld [vmem:[%s1 + $0x60] sm:$0xff]
      %v266 = vld [vmem:[%s1 + $0x68] sm:$0xff]
      %v267 = vld [vmem:[%s1 + $0x70] sm:$0xff]
      %v268 = vld [vmem:[%s1 + $0x78] sm:$0xff]
      %v285 = vlaneseq
      %v286 = vand.u32 %v285, 127
      %v287 = vlaneseq
      %v288 = vshrl.u32 %v287, 7
      %v289 = vsub.s32 %v286, %v288
      %v290 = vrot.slane %v237, %v289
      %v291 = vadd.s32 %v286, 4294967288
      %v292 = vlaneseq
      %v293 = vshrl.u32 %v292, 7
      %v294 = vsub.s32 %v291, %v293
      %v295 = vrot.slane %v238, %v294
      %vm296 = vcmask 130112
      %v297 = vsel %vm296, %v295, %v290
      %v298 = vadd.s32 %v286, 4294967280
      %v299 = vlaneseq
      %v300 = vshrl.u32 %v299, 7
      %v301 = vsub.s32 %v298, %v300
      %v302 = vrot.slane %v239, %v301
      %vm303 = vcmask 195712
      %v304 = vsel %vm303, %v302, %v297
      %v305 = vadd.s32 %v286, 4294967272
      %v306 = vlaneseq
      %v307 = vshrl.u32 %v306, 7
      %v308 = vsub.s32 %v305, %v307
      %v309 = vrot.slane %v240, %v308
      %vm310 = vcmask 261312
      %v311 = vsel %vm310, %v309, %v304
      %v312 = vadd.s32 %v286, 4294967264
      %v313 = vlaneseq
      %v314 = vshrl.u32 %v313, 7
      %v315 = vsub.s32 %v312, %v314
      %v316 = vrot.slane %v241, %v315
      %vm317 = vcmask 326912
      %v318 = vsel %vm317, %v316, %v311
      %v319 = vadd.s32 %v286, 4294967256
      %v320 = vlaneseq
      %v321 = vshrl.u32 %v320, 7
      %v322 = vsub.s32 %v319, %v321
      %v323 = vrot.slane %v242, %v322
      %vm324 = vcmask 392512
      %v325 = vsel %vm324, %v323, %v318
      %v326 = vadd.s32 %v286, 4294967248
      %v327 = vlaneseq
      %v328 = vshrl.u32 %v327, 7
      %v329 = vsub.s32 %v326, %v328
      %v330 = vrot.slane %v243, %v329
      %vm331 = vcmask 458112
      %v332 = vsel %vm331, %v330, %v325
      %v333 = vadd.s32 %v286, 4294967240
      %v334 = vlaneseq
      %v335 = vshrl.u32 %v334, 7
      %v336 = vsub.s32 %v333, %v335
      %v337 = vrot.slane %v244, %v336
      %vm338 = vcmask 523712
      %v339 = vsel %vm338, %v337, %v332
      %v340 = vadd.s32 %v286, 4294967232
      %v341 = vlaneseq
      %v342 = vshrl.u32 %v341, 7
      %v343 = vsub.s32 %v340, %v342
      %v344 = vrot.slane %v245, %v343
      %vm345 = vcmask 589312
      %v346 = vsel %vm345, %v344, %v339
      %v347 = vadd.s32 %v286, 4294967224
      %v348 = vlaneseq
      %v349 = vshrl.u32 %v348, 7
      %v350 = vsub.s32 %v347, %v349
      %v351 = vrot.slane %v246, %v350
      %vm352 = vcmask 654912
      %v353 = vsel %vm352, %v351, %v346
      %v354 = vadd.s32 %v286, 4294967216
      %v355 = vlaneseq
      %v356 = vshrl.u32 %v355, 7
      %v357 = vsub.s32 %v354, %v356
      %v358 = vrot.slane %v247, %v357
      %vm359 = vcmask 720512
      %v360 = vsel %vm359, %v358, %v353
      %v361 = vadd.s32 %v286, 4294967208
      %v362 = vlaneseq
      %v363 = vshrl.u32 %v362, 7
      %v364 = vsub.s32 %v361, %v363
      %v365 = vrot.slane %v248, %v364
      %vm366 = vcmask 786112
      %v367 = vsel %vm366, %v365, %v360
      %v368 = vadd.s32 %v286, 4294967200
      %v369 = vlaneseq
      %v370 = vshrl.u32 %v369, 7
      %v371 = vsub.s32 %v368, %v370
      %v372 = vrot.slane %v249, %v371
      %vm373 = vcmask 851712
      %v374 = vsel %vm373, %v372, %v367
      %v375 = vadd.s32 %v286, 4294967192
      %v376 = vlaneseq
      %v377 = vshrl.u32 %v376, 7
      %v378 = vsub.s32 %v375, %v377
      %v379 = vrot.slane %v250, %v378
      %vm380 = vcmask 917312
      %v381 = vsel %vm380, %v379, %v374
      %v382 = vadd.s32 %v286, 4294967184
      %v383 = vlaneseq
      %v384 = vshrl.u32 %v383, 7
      %v385 = vsub.s32 %v382, %v384
      %v386 = vrot.slane %v251, %v385
      %vm387 = vcmask 982912
      %v388 = vsel %vm387, %v386, %v381
      %v389 = vadd.s32 %v286, 4294967176
      %v390 = vlaneseq
      %v391 = vshrl.u32 %v390, 7
      %v392 = vsub.s32 %v389, %v391
      %v393 = vrot.slane %v252, %v392
      %vm394 = vcmask 1048512
      %v395 = vsel %vm394, %v393, %v388
      %397 = vmatprep.subr.mxu0 0.0
      %398 = vmatpush1.msra.mxu0 %v253
      %399 = vmatprep.subr.mxu0 0.0
      %400 = vmatpush1.msra.mxu0 %v254
      %401 = vmatprep.subr.mxu0 0.0
      %402 = vmatpush1.msra.mxu0 %v255
      %403 = vmatprep.subr.mxu0 0.0
      %404 = vmatpush1.msra.mxu0 %v256
      %405 = vmatprep.subr.mxu0 0.0
      %406 = vmatpush1.msra.mxu0 %v257
      %407 = vmatprep.subr.mxu0 0.0
      %408 = vmatpush1.msra.mxu0 %v258
      %409 = vmatprep.subr.mxu0 0.0
      %410 = vmatpush1.msra.mxu0 %v259
      %411 = vmatprep.subr.mxu0 0.0
      %412 = vmatpush1.msra.mxu0 %v260
      %413 = vmatprep.subr.mxu0 0.0
      %414 = vmatpush1.msra.mxu0 %v261
      %415 = vmatprep.subr.mxu0 0.0
      %416 = vmatpush1.msra.mxu0 %v262
      %417 = vmatprep.subr.mxu0 0.0
      %418 = vmatpush1.msra.mxu0 %v263
      %419 = vmatprep.subr.mxu0 0.0
      %420 = vmatpush1.msra.mxu0 %v264
      %421 = vmatprep.subr.mxu0 0.0
      %422 = vmatpush1.msra.mxu0 %v265
      %423 = vmatprep.subr.mxu0 0.0
      %424 = vmatpush1.msra.mxu0 %v266
      %425 = vmatprep.subr.mxu0 0.0
      %426 = vmatpush1.msra.mxu0 %v267
      %427 = vmatprep.subr.mxu0 0.0
      %428 = vmatpush1.msra.mxu0 %v268
      %429 = vmatprep.subr.mxu0 0.0
      %430 = vmatpush1.msra.mxu0 0.0
      %431 = vmatprep.subr.mxu0 0.0
      %432 = vmatpush1.msra.mxu0 0.0
      %433 = vmatprep.subr.mxu0 0.0
      %434 = vmatpush1.msra.mxu0 0.0
      %435 = vmatprep.subr.mxu0 0.0
      %436 = vmatpush1.msra.mxu0 0.0
      %437 = vmatprep.subr.mxu0 0.0
      %438 = vmatpush1.msra.mxu0 0.0
      %439 = vmatprep.subr.mxu0 0.0
      %440 = vmatpush1.msra.mxu0 0.0
      %441 = vmatprep.subr.mxu0 0.0
      %442 = vmatpush1.msra.mxu0 0.0
      %443 = vmatprep.subr.mxu0 0.0
      %444 = vmatpush1.msra.mxu0 0.0
      %445 = vmatprep.subr.mxu0 0.0
      %446 = vmatpush1.msra.mxu0 0.0
      %447 = vmatprep.subr.mxu0 0.0
      %448 = vmatpush1.msra.mxu0 0.0
      %449 = vmatprep.subr.mxu0 0.0
      %450 = vmatpush1.msra.mxu0 0.0
      %451 = vmatprep.subr.mxu0 0.0
      %452 = vmatpush1.msra.mxu0 0.0
      %453 = vmatprep.subr.mxu0 0.0
      %454 = vmatpush1.msra.mxu0 0.0
      %455 = vmatprep.subr.mxu0 0.0
      %456 = vmatpush1.msra.mxu0 0.0
      %457 = vmatprep.subr.mxu0 0.0
      %458 = vmatpush1.msra.mxu0 0.0
      %459 = vmatprep.subr.mxu0 0.0
      %460 = vmatpush1.msra.mxu0 0.0
      %461 = vmatprep.mubr.f32.mxu0 0.0
      %462 = vmatmul.mubr.f32.gmra.mrb[0].mxu0 %v395
      %v463 = vpop.f32.mrb[0].mxu0
      %v464 = vadd.f32 0.0, %v463
      %v465 = vpop.f32.mrb[0].mxu0
      %466 = vdwg.mxu0
      %v467 = vmax.f32 %v464, 0.0
      %v468 = vld [vmem:[%s2] sm:$0xff]
      %vm469 = vcmask 64512
      %v471 = vsel %vm469, %v467, 0
      %473 = vmatprep.subr.mxu0 0.0
      %474 = vmatpush1.msra.mxu0 %v468
      %475 = vmatprep.subr.mxu0 0.0
      %476 = vmatpush1.msra.mxu0 0.0
      %477 = vmatprep.subr.mxu0 0.0
      %478 = vmatpush1.msra.mxu0 0.0
      %479 = vmatprep.subr.mxu0 0.0
      %480 = vmatpush1.msra.mxu0 0.0
      %481 = vmatprep.subr.mxu0 0.0
      %482 = vmatpush1.msra.mxu0 0.0
      %483 = vmatprep.subr.mxu0 0.0
      %484 = vmatpush1.msra.mxu0 0.0
      %485 = vmatprep.subr.mxu0 0.0
      %486 = vmatpush1.msra.mxu0 0.0
      %487 = vmatprep.subr.mxu0 0.0
      %488 = vmatpush1.msra.mxu0 0.0
      %489 = vmatprep.subr.mxu0 0.0
      %490 = vmatpush1.msra.mxu0 0.0
      %491 = vmatprep.subr.mxu0 0.0
      %492 = vmatpush1.msra.mxu0 0.0
      %493 = vmatprep.subr.mxu0 0.0
      %494 = vmatpush1.msra.mxu0 0.0
      %495 = vmatprep.subr.mxu0 0.0
      %496 = vmatpush1.msra.mxu0 0.0
      %497 = vmatprep.subr.mxu0 0.0
      %498 = vmatpush1.msra.mxu0 0.0
      %499 = vmatprep.subr.mxu0 0.0
      %500 = vmatpush1.msra.mxu0 0.0
      %501 = vmatprep.subr.mxu0 0.0
      %502 = vmatpush1.msra.mxu0 0.0
      %503 = vmatprep.subr.mxu0 0.0
      %504 = vmatpush1.msra.mxu0 0.0
      %505 = vmatprep.subr.mxu0 0.0
      %506 = vmatpush1.msra.mxu0 0.0
      %507 = vmatprep.subr.mxu0 0.0
      %508 = vmatpush1.msra.mxu0 0.0
      %509 = vmatprep.subr.mxu0 0.0
      %510 = vmatpush1.msra.mxu0 0.0
      %511 = vmatprep.subr.mxu0 0.0
      %512 = vmatpush1.msra.mxu0 0.0
      %513 = vmatprep.subr.mxu0 0.0
      %514 = vmatpush1.msra.mxu0 0.0
      %515 = vmatprep.subr.mxu0 0.0
      %516 = vmatpush1.msra.mxu0 0.0
      %517 = vmatprep.subr.mxu0 0.0
      %518 = vmatpush1.msra.mxu0 0.0
      %519 = vmatprep.subr.mxu0 0.0
      %520 = vmatpush1.msra.mxu0 0.0
      %521 = vmatprep.subr.mxu0 0.0
      %522 = vmatpush1.msra.mxu0 0.0
      %523 = vmatprep.subr.mxu0 0.0
      %524 = vmatpush1.msra.mxu0 0.0
      %525 = vmatprep.subr.mxu0 0.0
      %526 = vmatpush1.msra.mxu0 0.0
      %527 = vmatprep.subr.mxu0 0.0
      %528 = vmatpush1.msra.mxu0 0.0
      %529 = vmatprep.subr.mxu0 0.0
      %530 = vmatpush1.msra.mxu0 0.0
      %531 = vmatprep.subr.mxu0 0.0
      %532 = vmatpush1.msra.mxu0 0.0
      %533 = vmatprep.subr.mxu0 0.0
      %534 = vmatpush1.msra.mxu0 0.0
      %535 = vmatprep.subr.mxu0 0.0
      %536 = vmatpush1.msra.mxu0 0.0
      %537 = vmatprep.mubr.f32.mxu0 0.0
      %538 = vmatmul.mubr.f32.gmra.mrb[0].mxu0 %v471
      %v539 = vpop.f32.mrb[0].mxu0
      %v540 = vadd.f32 0.0, %v539
      %v541 = vpop.f32.mrb[0].mxu0
      %542 = vdwg.mxu0
      %v543 = vxor.u32 %v540, 2147483648
      %v544 = vmul.f32 %v543, 1.442695
      %v545 = vpow.pop %v544
      %v546 = vadd.f32 %v545, 1.0
      %v547 = vrcp.pop %v546
      %v548 = vmul.f32 1.0, %v547
      %v549 = vlaneseq
      %v550 = vshrl.u32 %v549, 7
      %v551 = vsub.s32 0, %v550
      %v552 = vrot.slane %v548, %v551
      %554 = vbcast.lane.b32.xlu0 %v552, 256
      %v555 = vpop.permute.xlu0 %554
      %s557 = sor.u32 256, 8
      %558 = vbcast.lane.b32.xlu0 %v552, %s557
      %v559 = vpop.permute.xlu0 %558
      %s561 = sor.u32 256, 16
      %562 = vbcast.lane.b32.xlu0 %v552, %s561
      %v563 = vpop.permute.xlu0 %562
      %s565 = sor.u32 256, 24
      %566 = vbcast.lane.b32.xlu0 %v552, %s565
      %v567 = vpop.permute.xlu0 %566
      %s569 = sor.u32 256, 32
      %570 = vbcast.lane.b32.xlu0 %v552, %s569
      %v571 = vpop.permute.xlu0 %570
      %s573 = sor.u32 256, 40
      %574 = vbcast.lane.b32.xlu0 %v552, %s573
      %v575 = vpop.permute.xlu0 %574
      %s577 = sor.u32 256, 48
      %578 = vbcast.lane.b32.xlu0 %v552, %s577
      %v579 = vpop.permute.xlu0 %578
      %s581 = sor.u32 256, 56
      %582 = vbcast.lane.b32.xlu0 %v552, %s581
      %v583 = vpop.permute.xlu0 %582
      %s585 = sor.u32 256, 64
      %586 = vbcast.lane.b32.xlu0 %v552, %s585
      %v587 = vpop.permute.xlu0 %586
      %s589 = sor.u32 256, 72
      %590 = vbcast.lane.b32.xlu0 %v552, %s589
      %v591 = vpop.permute.xlu0 %590
      %s593 = sor.u32 256, 80
      %594 = vbcast.lane.b32.xlu0 %v552, %s593
      %v595 = vpop.permute.xlu0 %594
      %s597 = sor.u32 256, 88
      %598 = vbcast.lane.b32.xlu0 %v552, %s597
      %v599 = vpop.permute.xlu0 %598
      %s601 = sor.u32 256, 96
      %602 = vbcast.lane.b32.xlu0 %v552, %s601
      %v603 = vpop.permute.xlu0 %602
      %s605 = sor.u32 256, 104
      %606 = vbcast.lane.b32.xlu0 %v552, %s605
      %v607 = vpop.permute.xlu0 %606
      %s609 = sor.u32 256, 112
      %610 = vbcast.lane.b32.xlu0 %v552, %s609
      %v611 = vpop.permute.xlu0 %610
      %s613 = sor.u32 256, 120
      %614 = vbcast.lane.b32.xlu0 %v552, %s613
      %v615 = vpop.permute.xlu0 %614
      %v616 = vmul.f32 %v171, %v555
      %v617 = vmul.f32 %v172, %v559
      %v618 = vmul.f32 %v173, %v563
      %v619 = vmul.f32 %v174, %v567
      %v620 = vmul.f32 %v175, %v571
      %v621 = vmul.f32 %v176, %v575
      %v622 = vmul.f32 %v177, %v579
      %v623 = vmul.f32 %v178, %v583
      %v624 = vmul.f32 %v179, %v587
      %v625 = vmul.f32 %v180, %v591
      %v626 = vmul.f32 %v181, %v595
      %v627 = vmul.f32 %v182, %v599
      %v628 = vmul.f32 %v183, %v603
      %v629 = vmul.f32 %v184, %v607
      %v630 = vmul.f32 %v185, %v611
      %v631 = vmul.f32 %v186, %v615
      %632 = vst.msk [vmem:[%s170] sm:$0xff] %vm187, %v616
      %633 = vst.msk [vmem:[%s170 + $0x8] sm:$0xff] %vm187, %v617
      %634 = vst.msk [vmem:[%s170 + $0x10] sm:$0xff] %vm187, %v618
      %635 = vst.msk [vmem:[%s170 + $0x18] sm:$0xff] %vm187, %v619
      %636 = vst.msk [vmem:[%s170 + $0x20] sm:$0xff] %vm187, %v620
      %637 = vst.msk [vmem:[%s170 + $0x28] sm:$0xff] %vm187, %v621
      %638 = vst.msk [vmem:[%s170 + $0x30] sm:$0xff] %vm187, %v622
      %639 = vst.msk [vmem:[%s170 + $0x38] sm:$0xff] %vm187, %v623
      %640 = vst.msk [vmem:[%s170 + $0x40] sm:$0xff] %vm187, %v624
      %641 = vst.msk [vmem:[%s170 + $0x48] sm:$0xff] %vm187, %v625
      %642 = vst.msk [vmem:[%s170 + $0x50] sm:$0xff] %vm187, %v626
      %643 = vst.msk [vmem:[%s170 + $0x58] sm:$0xff] %vm187, %v627
      %644 = vst.msk [vmem:[%s170 + $0x60] sm:$0xff] %vm187, %v628
      %645 = vst.msk [vmem:[%s170 + $0x68] sm:$0xff] %vm187, %v629
      %646 = vst.msk [vmem:[%s170 + $0x70] sm:$0xff] %vm187, %v630
      %647 = vst.msk [vmem:[%s170 + $0x78] sm:$0xff] %vm187, %v631
      %p648 = scmp.lt.s32.totalorder %s14, 1
      %s649 = scalar_select %p648, %s14, 1
      %s650 = smul.addr %s649, 16
      %s651 = smul.addr %s650, 8
      %s652 = scalar_lea.vmem %s3, %s651
      // Predicated region
      $region33: #{tpu_custom_call.1} parent=31 // pred_check
        %p653 = pneg %p100
      $region34: #{tpu_custom_call.1} parent=31 // pred_check_branch
        %655 = sbr.rel (%p653) target = $region36
      $region35: #{tpu_custom_call.1} parent=31 // pred_region
        _
      $region36: #{tpu_custom_call.1} parent=31 // pred_fallthru
        _
    $region32: #{tpu_custom_call.1} parent=5 // pred_fallthru
      _
    %p656 = scmp.le.s32.totalorder 2, %s9
    // Predicated region
    $region37: #{tpu_custom_call.1} parent=5 // pred_check
      %p657 = pneg %p656
    $region38: #{tpu_custom_call.1} parent=5 // pred_check_branch
      %659 = sbr.rel (%p657) target = $region40
    $region39: #{tpu_custom_call.1} parent=5 // pred_region
      %s660 = ssub.s32 %s9, 2
      // Predicated region
      $region41: #{tpu_custom_call.1} parent=39 // pred_check
        %p661 = pneg %p106
      $region42: #{tpu_custom_call.1} parent=39 // pred_check_branch
        %663 = sbr.rel (%p661) target = $region44
      $region43: #{tpu_custom_call.1} parent=39 // pred_region
        %p664 = scmp.lt.s32.totalorder %s15, 1
        %s665 = scalar_select %p664, %s15, 1
        %s666 = smul.addr %s665, 16
        %s667 = smul.addr %s666, 8
        %s668 = scalar_lea.vmem %s3, %s667
      $region44: #{tpu_custom_call.1} parent=39 // pred_fallthru
        _
    $region40: #{tpu_custom_call.1} parent=5 // pred_fallthru
      _
  $region6: #{tpu_custom_call.1} parent=0 // loop_footer
    %s13 = sadd.s32 1, %s9
  $region7: #{tpu_custom_call.1} parent=0 // loop_footer_branch
    %8 = sbr.rel target = $region3
  $region8: #{tpu_custom_call.1} parent=0 // loop_exit
    _

</llo_original>
